<compile_context>
chip_gen: v7x
topology: tpu7x:2x2x1
jax: 0.10.0
libtpu: 0.0.40
codegen_flags: <defaults>
</compile_context>

<pallas_src>
import math
from functools import partial

import jax
import jax.numpy as jnp
import numpy as np
from jax.experimental import pallas as pl
from jax.experimental.pallas import tpu as pltpu

KH, KW = 7, 7
PAD = 2          # PyTorch padding=(2, 2)
LANES = 128


def _round_up(x, m):
    return (x + m - 1) // m * m


def _tree_sum(xs):
    """Pairwise tree reduce (breaks the serial VALU add chain)."""
    xs = list(xs)
    while len(xs) > 1:
        nxt = [xs[i] + xs[i + 1] for i in range(0, len(xs) - 1, 2)]
        if len(xs) % 2:
            nxt.append(xs[-1])
        xs = nxt
    return xs[0]


def gaussian2d_unnormalized(shape=(7, 7), sigma=1.0):
    """Same as the module's gaussian2D_unnormalized (numpy, float64)."""
    m, n = [(ss - 1.0) / 2.0 for ss in shape]
    y, x = np.ogrid[-m:m + 1, -n:n + 1]
    h = np.exp(-(x * x + y * y) / (2.0 * sigma * sigma))
    h[h < np.finfo(h.dtype).eps * h.max()] = 0
    return h


def _blur_kernel(wv_ref, wh_ref, xp_ref, out_ref, *, C, Ws):
    """Channel-packed separable 7x7 blur, summed over channels, one batch tile.

    wv_ref : VMEM (KH, Wl) per-lane vertical taps (constant within each stripe)
    wh_ref : VMEM (KW, Wl) per-lane horizontal taps (1/(2*pi*std^2) folded in)
    xp_ref : VMEM (Bt, Hp, Wl) zero-padded input; channel c occupies lanes
             [c*Ws, (c+1)*Ws) with the image at stripe offset PAD and zero
             halos (PAD wide) on both sides; lanes >= C*Ws are zero.
    out_ref: VMEM (Bt, Ho, Wl) lane-dense output; the channel-summed result is
             in lanes [0, Wo), the rest is don't-care (sliced off in wrapper).
    """
    Bt, Hp, Wl = xp_ref.shape
    Ho = out_ref.shape[1]

    # Hoist per-tap lane vectors out of the batch loop (read once per step).
    wv_rows = [wv_ref[ky:ky + 1, :] for ky in range(KH)]   # each (1, Wl)
    wh_rows = [wh_ref[kx:kx + 1, :] for kx in range(KW)]

    # Bt is kept small by the wrapper (VMEM budget + >=2 grid steps), so a
    # static Python loop is fine: each iteration ends in a store, so live
    # ranges do not accumulate across b.
    for b in range(Bt):
        # Vertical pass: 7 sublane-shifted full-lane loads (all channels at
        # once), weighted by the per-lane taps, tree-reduced.
        vt = [xp_ref[b, ky:ky + Ho, :] * wv_rows[ky] for ky in range(KH)]
        col = _tree_sum(vt)                                  # (Ho, Wl)

        # Horizontal pass: output lane c*Ws + x needs col[c*Ws + x + kx], i.e.
        # a static roll by -kx (XLU slot, not VALU).  Within the kept lanes
        # (x < Wo) the read never crosses a stripe boundary.
        ht = []
        for kx in range(KW):
            sh = col if kx == 0 else pltpu.roll(col, shift=Wl - kx, axis=1)
            ht.append(sh * wh_rows[kx])
        row = _tree_sum(ht)                                  # (Ho, Wl)

        # Channel sum: shift every stripe down onto lanes [0, Ws) and add.
        parts = [row]
        for c in range(1, C):
            parts.append(pltpu.roll(row, shift=Wl - c * Ws, axis=1))
        acc = _tree_sum(parts)

        out_ref[b] = acc.astype(out_ref.dtype)               # full-lane store


def _pick_batch_tile(B, bytes_per_sample, vmem_budget):
    """Largest divisor of B giving >= 2 grid steps (v7x megacore + DMA
    pipelining) while fitting the per-step double-buffered VMEM budget."""
    if B <= 1:
        return 1
    cap = min(B // 2, max(1, vmem_budget // max(bytes_per_sample, 1)))
    cap = max(1, min(cap, B))
    for t in range(cap, 0, -1):
        if B % t == 0:
            return t
    return 1


def blur_layer_forward(img_4d, wv, wh, *, batch_tile=None):
    """img_4d: (B, C, H, W) f32; wv/wh: (C, 7) f32 separable taps.

    Returns (B, 1, H-2, W-2) f32, matching
    F.conv2d(img_4d, weights (1, C, 7, 7), padding=(2, 2)).
    """
    B, C, H, W = img_4d.shape
    Hp = H + 2 * PAD
    Ws = W + 2 * PAD                      # stripe width (padded image width)
    Ho = Hp - KH + 1                      # = H - 2
    Wo = Ws - KW + 1                      # = W - 2
    Wl = _round_up(C * Ws, LANES)         # lane-dense packed width

    # --- layout plumbing (not compute): fold the conv zero-padding in and
    # pack channels as lane stripes so every kernel op is full-lane and the
    # output store is lane-dense.
    xp = jnp.pad(img_4d.astype(jnp.float32),
                 ((0, 0), (0, 0), (PAD, PAD), (PAD, PAD)))        # (B,C,Hp,Ws)
    xp = jnp.transpose(xp, (0, 2, 1, 3)).reshape(B, Hp, C * Ws)   # (B,Hp,C*Ws)
    if Wl > C * Ws:
        xp = jnp.pad(xp, ((0, 0), (0, 0), (0, Wl - C * Ws)))      # (B,Hp,Wl)

    # Per-lane tap vectors: lane c*Ws + j carries channel c's tap value.
    wv_vec = jnp.zeros((KH, Wl), jnp.float32).at[:, :C * Ws].set(
        jnp.repeat(wv.T.astype(jnp.float32), Ws, axis=1))
    wh_vec = jnp.zeros((KW, Wl), jnp.float32).at[:, :C * Ws].set(
        jnp.repeat(wh.T.astype(jnp.float32), Ws, axis=1))

    # --- explicit VMEM budget (v7x: 64 MiB physical vs 128 MiB on v5e/v6e).
    try:
        info = pltpu.get_tpu_info()
        vmem_cap = int(getattr(info, "vmem_capacity_bytes", 0)) or (64 << 20)
    except Exception:
        vmem_cap = 64 << 20                       # conservative v7x floor
    vmem_budget = (vmem_cap * 3) // 4             # headroom for compiler temps

    bytes_per_sample = 4 * Wl * 2 * (Hp + Ho)     # 2x-buffered input + output
    tap_bytes = 2 * 4 * Wl * (KH + KW)
    if batch_tile is None:
        batch_tile = _pick_batch_tile(B, bytes_per_sample,
                                      vmem_budget - tap_bytes)
    assert B % batch_tile == 0, (B, batch_tile)   # no silent whole-batch fallback
    grid = (B // batch_tile,)

    out_padded = pl.pallas_call(
        partial(_blur_kernel, C=C, Ws=Ws),
        out_shape=jax.ShapeDtypeStruct((B, Ho, Wl), jnp.float32),
        grid=grid,
        in_specs=[
            pl.BlockSpec((KH, Wl), lambda b: (0, 0)),              # wv taps
            pl.BlockSpec((KW, Wl), lambda b: (0, 0)),              # wh taps
            pl.BlockSpec((batch_tile, Hp, Wl), lambda b: (b, 0, 0)),
        ],
        out_specs=pl.BlockSpec((batch_tile, Ho, Wl), lambda b: (b, 0, 0)),
        compiler_params=pltpu.CompilerParams(
            dimension_semantics=("parallel",),
            vmem_limit_bytes=int(vmem_budget),
        ),
    )(wv_vec, wh_vec, xp)

    # Valid output lives in lanes [0, Wo); slice it out and add the 1-channel dim.
    return out_padded[:, None, :, :Wo]


def make_blur_weights(num_emitters, key, std_min=0.8, std_max=1.2):
    """Separable per-emitter taps + full 2D weights (for the reference conv).

    BlurLayer draws std_c ~ U[std_min, std_max] with torch.rand on every
    forward; here the draw is a deterministic host-side jax.random sample.
    weight_c = 1/(2*pi*std_c^2) * gauss ** (1/std_c^2) and gauss is separable
    (the eps-threshold in gaussian2D_unnormalized never triggers for sigma=1,
    7x7 - min tap ~1.2e-4 >> eps), so weight_c = wv_c (outer) wh_c exactly.
    """
    offs = np.arange(KH, dtype=np.float64) - (KH - 1) / 2.0
    g1 = np.exp(-(offs ** 2) / 2.0)                                   # (7,)

    stds = std_min + (std_max - std_min) * jax.random.uniform(
        key, (num_emitters,), dtype=jnp.float32)                      # (C,)
    inv_var = (1.0 / (stds * stds))[:, None]                          # (C,1)
    norm = (1.0 / (2.0 * math.pi * stds * stds))[:, None]             # (C,1)

    g1j = jnp.asarray(g1, dtype=jnp.float32)[None, :]                 # (1,7)
    wv = jnp.power(g1j, inv_var)                                      # (C,7)
    wh = norm * jnp.power(g1j, inv_var)                               # (C,7)

    # Full 2D weights built exactly like the PyTorch module (reference only).
    gauss2d = jnp.asarray(gaussian2d_unnormalized((KH, KW), 1.0),
                          dtype=jnp.float32)                          # (7,7)
    w2d = norm[:, :, None] * jnp.power(gauss2d[None], inv_var[:, :, None])
    return (wv.astype(jnp.float32), wh.astype(jnp.float32),
            w2d.astype(jnp.float32))


def _reference(img_4d, weights_2d):
    # Pure-JAX reference: cross-correlation, NCHW / OIHW, padding 2.
    w = weights_2d[None]  # (1, C, 7, 7)
    return jax.lax.conv_general_dilated(
        img_4d, w, window_strides=(1, 1), padding=((PAD, PAD), (PAD, PAD)),
        dimension_numbers=("NCHW", "OIHW", "NCHW"))


if __name__ == "__main__":
    key = jax.random.PRNGKey(0)
    k_img, k_std = jax.random.split(key)

    B, C, H, W = 2, 4, 16, 16
    img = jax.random.uniform(k_img, (B, C, H, W), dtype=jnp.float32)

    wv, wh, w2d = make_blur_weights(C, k_std)

    out = blur_layer_forward(img, wv, wh)
    out = jax.block_until_ready(out)

    ref = _reference(img, w2d)
    assert out.shape == (B, 1, H - 2, W - 2), out.shape
    err = float(jnp.max(jnp.abs(out - ref)))
    assert err < 3e-4, err

    print("KERNEL_OK")
</pallas_src>

<mosaic_0001>
module attributes {stable_mosaic.version = 11 : i64} {
  func.func @_blur_kernel(%arg0: i32, %arg1: memref<7x128xf32, #tpu.memory_space<vmem>>, %arg2: memref<7x128xf32, #tpu.memory_space<vmem>>, %arg3: memref<1x20x128xf32, #tpu.memory_space<vmem>>, %arg4: memref<1x14x128xf32, #tpu.memory_space<vmem>>) attributes {dimension_semantics = [#tpu.dimension_semantics<parallel>], iteration_bounds = array<i64: 2>, scalar_prefetch = 0 : i64, scratch_operands = 0 : i64, tpu.core_type = #tpu.core_type<tc>, window_params = [{pipeline_mode = #tpu.pipeline_mode<synchronous>, transform_indices = @transform_0, window_bounds = array<i64: 7, 128>}, {pipeline_mode = #tpu.pipeline_mode<synchronous>, transform_indices = @transform_1, window_bounds = array<i64: 7, 128>}, {transform_indices = @transform_2, window_bounds = array<i64: 1, 20, 128>}, {transform_indices = @transform_3, window_bounds = array<i64: 1, 14, 128>}]} {
    %c0 = arith.constant 0 : index
    %c0_0 = arith.constant 0 : index
    %0 = vector.load %arg1[%c0, %c0_0] : memref<7x128xf32, #tpu.memory_space<vmem>>, vector<1x128xf32>
    %c1 = arith.constant 1 : index
    %c0_1 = arith.constant 0 : index
    %1 = vector.load %arg1[%c1, %c0_1] : memref<7x128xf32, #tpu.memory_space<vmem>>, vector<1x128xf32>
    %c2 = arith.constant 2 : index
    %c0_2 = arith.constant 0 : index
    %2 = vector.load %arg1[%c2, %c0_2] : memref<7x128xf32, #tpu.memory_space<vmem>>, vector<1x128xf32>
    %c3 = arith.constant 3 : index
    %c0_3 = arith.constant 0 : index
    %3 = vector.load %arg1[%c3, %c0_3] : memref<7x128xf32, #tpu.memory_space<vmem>>, vector<1x128xf32>
    %c4 = arith.constant 4 : index
    %c0_4 = arith.constant 0 : index
    %4 = vector.load %arg1[%c4, %c0_4] : memref<7x128xf32, #tpu.memory_space<vmem>>, vector<1x128xf32>
    %c5 = arith.constant 5 : index
    %c0_5 = arith.constant 0 : index
    %5 = vector.load %arg1[%c5, %c0_5] : memref<7x128xf32, #tpu.memory_space<vmem>>, vector<1x128xf32>
    %c6 = arith.constant 6 : index
    %c0_6 = arith.constant 0 : index
    %6 = vector.load %arg1[%c6, %c0_6] : memref<7x128xf32, #tpu.memory_space<vmem>>, vector<1x128xf32>
    %c0_7 = arith.constant 0 : index
    %c0_8 = arith.constant 0 : index
    %7 = vector.load %arg2[%c0_7, %c0_8] : memref<7x128xf32, #tpu.memory_space<vmem>>, vector<1x128xf32>
    %c1_9 = arith.constant 1 : index
    %c0_10 = arith.constant 0 : index
    %8 = vector.load %arg2[%c1_9, %c0_10] : memref<7x128xf32, #tpu.memory_space<vmem>>, vector<1x128xf32>
    %c2_11 = arith.constant 2 : index
    %c0_12 = arith.constant 0 : index
    %9 = vector.load %arg2[%c2_11, %c0_12] : memref<7x128xf32, #tpu.memory_space<vmem>>, vector<1x128xf32>
    %c3_13 = arith.constant 3 : index
    %c0_14 = arith.constant 0 : index
    %10 = vector.load %arg2[%c3_13, %c0_14] : memref<7x128xf32, #tpu.memory_space<vmem>>, vector<1x128xf32>
    %c4_15 = arith.constant 4 : index
    %c0_16 = arith.constant 0 : index
    %11 = vector.load %arg2[%c4_15, %c0_16] : memref<7x128xf32, #tpu.memory_space<vmem>>, vector<1x128xf32>
    %c5_17 = arith.constant 5 : index
    %c0_18 = arith.constant 0 : index
    %12 = vector.load %arg2[%c5_17, %c0_18] : memref<7x128xf32, #tpu.memory_space<vmem>>, vector<1x128xf32>
    %c6_19 = arith.constant 6 : index
    %c0_20 = arith.constant 0 : index
    %13 = vector.load %arg2[%c6_19, %c0_20] : memref<7x128xf32, #tpu.memory_space<vmem>>, vector<1x128xf32>
    %c0_21 = arith.constant 0 : index
    %c0_22 = arith.constant 0 : index
    %c0_23 = arith.constant 0 : index
    %14 = vector.load %arg3[%c0_21, %c0_22, %c0_23] : memref<1x20x128xf32, #tpu.memory_space<vmem>>, vector<1x14x128xf32>
    %15 = vector.shape_cast %14 : vector<1x14x128xf32> to vector<14x128xf32>
    %16 = vector.broadcast %0 : vector<1x128xf32> to vector<14x128xf32>
    %17 = arith.mulf %15, %16 : vector<14x128xf32>
    %c0_24 = arith.constant 0 : index
    %c1_25 = arith.constant 1 : index
    %c0_26 = arith.constant 0 : index
    %18 = vector.load %arg3[%c0_24, %c1_25, %c0_26] : memref<1x20x128xf32, #tpu.memory_space<vmem>>, vector<1x14x128xf32>
    %19 = vector.shape_cast %18 : vector<1x14x128xf32> to vector<14x128xf32>
    %20 = vector.broadcast %1 : vector<1x128xf32> to vector<14x128xf32>
    %21 = arith.mulf %19, %20 : vector<14x128xf32>
    %c0_27 = arith.constant 0 : index
    %c2_28 = arith.constant 2 : index
    %c0_29 = arith.constant 0 : index
    %22 = vector.load %arg3[%c0_27, %c2_28, %c0_29] : memref<1x20x128xf32, #tpu.memory_space<vmem>>, vector<1x14x128xf32>
    %23 = vector.shape_cast %22 : vector<1x14x128xf32> to vector<14x128xf32>
    %24 = vector.broadcast %2 : vector<1x128xf32> to vector<14x128xf32>
    %25 = arith.mulf %23, %24 : vector<14x128xf32>
    %c0_30 = arith.constant 0 : index
    %c3_31 = arith.constant 3 : index
    %c0_32 = arith.constant 0 : index
    %26 = vector.load %arg3[%c0_30, %c3_31, %c0_32] : memref<1x20x128xf32, #tpu.memory_space<vmem>>, vector<1x14x128xf32>
    %27 = vector.shape_cast %26 : vector<1x14x128xf32> to vector<14x128xf32>
    %28 = vector.broadcast %3 : vector<1x128xf32> to vector<14x128xf32>
    %29 = arith.mulf %27, %28 : vector<14x128xf32>
    %c0_33 = arith.constant 0 : index
    %c4_34 = arith.constant 4 : index
    %c0_35 = arith.constant 0 : index
    %30 = vector.load %arg3[%c0_33, %c4_34, %c0_35] : memref<1x20x128xf32, #tpu.memory_space<vmem>>, vector<1x14x128xf32>
    %31 = vector.shape_cast %30 : vector<1x14x128xf32> to vector<14x128xf32>
    %32 = vector.broadcast %4 : vector<1x128xf32> to vector<14x128xf32>
    %33 = arith.mulf %31, %32 : vector<14x128xf32>
    %c0_36 = arith.constant 0 : index
    %c5_37 = arith.constant 5 : index
    %c0_38 = arith.constant 0 : index
    %34 = vector.load %arg3[%c0_36, %c5_37, %c0_38] : memref<1x20x128xf32, #tpu.memory_space<vmem>>, vector<1x14x128xf32>
    %35 = vector.shape_cast %34 : vector<1x14x128xf32> to vector<14x128xf32>
    %36 = vector.broadcast %5 : vector<1x128xf32> to vector<14x128xf32>
    %37 = arith.mulf %35, %36 : vector<14x128xf32>
    %c0_39 = arith.constant 0 : index
    %c6_40 = arith.constant 6 : index
    %c0_41 = arith.constant 0 : index
    %38 = vector.load %arg3[%c0_39, %c6_40, %c0_41] : memref<1x20x128xf32, #tpu.memory_space<vmem>>, vector<1x14x128xf32>
    %39 = vector.shape_cast %38 : vector<1x14x128xf32> to vector<14x128xf32>
    %40 = vector.broadcast %6 : vector<1x128xf32> to vector<14x128xf32>
    %41 = arith.mulf %39, %40 : vector<14x128xf32>
    %42 = arith.addf %17, %21 : vector<14x128xf32>
    %43 = arith.addf %25, %29 : vector<14x128xf32>
    %44 = arith.addf %33, %37 : vector<14x128xf32>
    %45 = arith.addf %42, %43 : vector<14x128xf32>
    %46 = arith.addf %44, %41 : vector<14x128xf32>
    %47 = arith.addf %45, %46 : vector<14x128xf32>
    %48 = vector.broadcast %7 : vector<1x128xf32> to vector<14x128xf32>
    %49 = arith.mulf %47, %48 : vector<14x128xf32>
    %c127_i32 = arith.constant 127 : i32
    %50 = tpu.dynamic_rotate %47 by %c127_i32 dim 1 : vector<14x128xf32>, i32 -> vector<14x128xf32>
    %51 = vector.broadcast %8 : vector<1x128xf32> to vector<14x128xf32>
    %52 = arith.mulf %50, %51 : vector<14x128xf32>
    %c126_i32 = arith.constant 126 : i32
    %53 = tpu.dynamic_rotate %47 by %c126_i32 dim 1 : vector<14x128xf32>, i32 -> vector<14x128xf32>
    %54 = vector.broadcast %9 : vector<1x128xf32> to vector<14x128xf32>
    %55 = arith.mulf %53, %54 : vector<14x128xf32>
    %c125_i32 = arith.constant 125 : i32
    %56 = tpu.dynamic_rotate %47 by %c125_i32 dim 1 : vector<14x128xf32>, i32 -> vector<14x128xf32>
    %57 = vector.broadcast %10 : vector<1x128xf32> to vector<14x128xf32>
    %58 = arith.mulf %56, %57 : vector<14x128xf32>
    %c124_i32 = arith.constant 124 : i32
    %59 = tpu.dynamic_rotate %47 by %c124_i32 dim 1 : vector<14x128xf32>, i32 -> vector<14x128xf32>
    %60 = vector.broadcast %11 : vector<1x128xf32> to vector<14x128xf32>
    %61 = arith.mulf %59, %60 : vector<14x128xf32>
    %c123_i32 = arith.constant 123 : i32
    %62 = tpu.dynamic_rotate %47 by %c123_i32 dim 1 : vector<14x128xf32>, i32 -> vector<14x128xf32>
    %63 = vector.broadcast %12 : vector<1x128xf32> to vector<14x128xf32>
    %64 = arith.mulf %62, %63 : vector<14x128xf32>
    %c122_i32 = arith.constant 122 : i32
    %65 = tpu.dynamic_rotate %47 by %c122_i32 dim 1 : vector<14x128xf32>, i32 -> vector<14x128xf32>
    %66 = vector.broadcast %13 : vector<1x128xf32> to vector<14x128xf32>
    %67 = arith.mulf %65, %66 : vector<14x128xf32>
    %68 = arith.addf %49, %52 : vector<14x128xf32>
    %69 = arith.addf %55, %58 : vector<14x128xf32>
    %70 = arith.addf %61, %64 : vector<14x128xf32>
    %71 = arith.addf %68, %69 : vector<14x128xf32>
    %72 = arith.addf %70, %67 : vector<14x128xf32>
    %73 = arith.addf %71, %72 : vector<14x128xf32>
    %c108_i32 = arith.constant 108 : i32
    %74 = tpu.dynamic_rotate %73 by %c108_i32 dim 1 : vector<14x128xf32>, i32 -> vector<14x128xf32>
    %c88_i32 = arith.constant 88 : i32
    %75 = tpu.dynamic_rotate %73 by %c88_i32 dim 1 : vector<14x128xf32>, i32 -> vector<14x128xf32>
    %c68_i32 = arith.constant 68 : i32
    %76 = tpu.dynamic_rotate %73 by %c68_i32 dim 1 : vector<14x128xf32>, i32 -> vector<14x128xf32>
    %77 = arith.addf %73, %74 : vector<14x128xf32>
    %78 = arith.addf %75, %76 : vector<14x128xf32>
    %79 = arith.addf %77, %78 : vector<14x128xf32>
    %c0_42 = arith.constant 0 : index
    %c0_43 = arith.constant 0 : index
    %c0_44 = arith.constant 0 : index
    %80 = vector.load %arg4[%c0_42, %c0_43, %c0_44] : memref<1x14x128xf32, #tpu.memory_space<vmem>>, vector<1x14x128xf32>
    %81 = vector.shape_cast %80 : vector<1x14x128xf32> to vector<14x128xf32>
    %82 = vector.shape_cast %79 : vector<14x128xf32> to vector<1x14x128xf32>
    tpu.vector_store %arg4[%c0_42, %c0_43, %c0_44], %82 {strides = array<i32>} : memref<1x14x128xf32, #tpu.memory_space<vmem>>, vector<1x14x128xf32>,
    return
  }
  func.func @transform_0(%arg0: i32) -> (i32, i32) {
    %c0_i32 = arith.constant 0 : i32
    %c0_i32_0 = arith.constant 0 : i32
    %c0_i32_1 = arith.constant 0 : i32
    return %c0_i32, %c0_i32_0 : i32, i32
  }
  func.func @transform_1(%arg0: i32) -> (i32, i32) {
    %c0_i32 = arith.constant 0 : i32
    %c0_i32_0 = arith.constant 0 : i32
    %c0_i32_1 = arith.constant 0 : i32
    return %c0_i32, %c0_i32_0 : i32, i32
  }
  func.func @transform_2(%arg0: i32) -> (i32, i32, i32) {
    %c0_i32 = arith.constant 0 : i32
    %c0_i32_0 = arith.constant 0 : i32
    %c0_i32_1 = arith.constant 0 : i32
    return %arg0, %c0_i32, %c0_i32_0 : i32, i32, i32
  }
  func.func @transform_3(%arg0: i32) -> (i32, i32, i32) {
    %c0_i32 = arith.constant 0 : i32
    %c0_i32_0 = arith.constant 0 : i32
    %c0_i32_1 = arith.constant 0 : i32
    return %arg0, %c0_i32, %c0_i32_0 : i32, i32, i32
  }
}

</mosaic_0001>

<llo_original>
// kernel: tpu_custom_call.1
$region0: #{tpu_custom_call.1}
  #allocation0 [shape = 'u32[]', space=smem, size = 0x4, offset = 0x4, fixed_abs, tag = 'smem constant byte address 0x4 - core index']
  #allocation1 [shape = 'u32[144,128]{1,0:T(1,128)}', space=vmem, size = 0x12000, scoped, tag = 'internal scratch']
  %s0 = inlined_call_operand.vmem [shape: f32[7,128], index: 0, kind: input, shape index: {}]
  %s1 = inlined_call_operand.vmem [shape: f32[7,128], index: 1, kind: input, shape index: {}]
  %s2 = inlined_call_operand.vmem [shape: f32[2,20,128], index: 2, kind: input, shape index: {}]
  %s3 = inlined_call_operand.vmem [shape: f32[2,14,128], index: 3, kind: output, shape index: {}]
  %s4 = sld [smem:[#allocation0]]
  $region45: #{tpu_custom_call.1} parent=0
    _
  %s6 = ssub.s32 1, %s4
  %s7 = scalar_select 0, %s6, %s4
  loop: start=0, step=1, limit=4
  $region2: #{tpu_custom_call.1} parent=0 // loop_pre_header
    _
  $region3: #{tpu_custom_call.1} parent=0 // loop_header
    %s9 = sphi 0, %s13
    %p10 = scmp.ge.s32.totalorder %s9, 4
    %s17 = sphi 0, %s17
    %s19 = sphi 0, %s17
    %s20 = sphi 0, %s19
    %s34 = sphi 0, %s20
    %s38 = sphi 0, %s38
    %s40 = sphi 0, %s38
    %s41 = sphi 0, %s40
    %s55 = sphi 0, %s41
    %s61 = sphi 0, %s63
    %s64 = sphi 0, %s61
    %s65 = sphi 0, %s64
    %s81 = sphi 0, %s65
    %s87 = sphi 0, %s89
    %s90 = sphi 0, %s87
    %s91 = sphi 0, %s90
    %s107 = sphi 0, %s91
  $region4: #{tpu_custom_call.1} parent=0 // loop_header_branch
    %12 = sbr.rel (%p10) target = $region8
  $region5: #{tpu_custom_call.1} parent=0 // loop_body
    %s14 = ssub.s32 %s9, 1
    %s15 = ssub.s32 %s9, 2
    %s16 = sadd.s32 %s9, 1
    %s18 = sadd.s32 %s17, 1
    %p21 = scmp.eq.s32.totalorder %s9, 1
    %p22 = scmp.ne.s32.totalorder %s17, %s19
    %p23 = scmp.eq.s32.totalorder %s9, 0
    %p24 = por %p22, %p23
    %p25 = scmp.ne.s32.totalorder %s17, %s19
    %p26 = scmp.eq.s32.totalorder %s14, 1
    %p27 = por %p25, %p26
    %p28 = scmp.ne.s32.totalorder %s19, %s20
    %p29 = scmp.eq.s32.totalorder %s14, 0
    %p30 = por %p28, %p29
    %p31 = scmp.ne.s32.totalorder %s19, %s20
    %p32 = scmp.eq.s32.totalorder %s15, 1
    %p33 = por %p31, %p32
    %p35 = scmp.ne.s32.totalorder %s20, %s34
    %p36 = scmp.eq.s32.totalorder %s15, 0
    %p37 = por %p35, %p36
    %s39 = sadd.s32 %s38, 1
    %p42 = scmp.eq.s32.totalorder %s9, 1
    %p43 = scmp.ne.s32.totalorder %s38, %s40
    %p44 = scmp.eq.s32.totalorder %s9, 0
    %p45 = por %p43, %p44
    %p46 = scmp.ne.s32.totalorder %s38, %s40
    %p47 = scmp.eq.s32.totalorder %s14, 1
    %p48 = por %p46, %p47
    %p49 = scmp.ne.s32.totalorder %s40, %s41
    %p50 = scmp.eq.s32.totalorder %s14, 0
    %p51 = por %p49, %p50
    %p52 = scmp.ne.s32.totalorder %s40, %s41
    %p53 = scmp.eq.s32.totalorder %s15, 1
    %p54 = por %p52, %p53
    %p56 = scmp.ne.s32.totalorder %s41, %s55
    %p57 = scmp.eq.s32.totalorder %s15, 0
    %p58 = por %p56, %p57
    %s59 = ssub.s32 %s9, %s16
    %p60 = scmp.eq.s32.totalorder %s59, 0
    %s62 = sadd.s32 %s61, 1
    %s63 = scalar_select %p60, %s61, %s62
    %p66 = pneg %p60
    %p67 = scmp.eq.s32.totalorder %s9, 1
    %p68 = por %p66, %p67
    %p69 = scmp.ne.s32.totalorder %s61, %s64
    %p70 = scmp.eq.s32.totalorder %s9, 0
    %p71 = por %p69, %p70
    %p72 = scmp.ne.s32.totalorder %s61, %s64
    %p73 = scmp.eq.s32.totalorder %s14, 1
    %p74 = por %p72, %p73
    %p75 = scmp.ne.s32.totalorder %s64, %s65
    %p76 = scmp.eq.s32.totalorder %s14, 0
    %p77 = por %p75, %p76
    %p78 = scmp.ne.s32.totalorder %s64, %s65
    %p79 = scmp.eq.s32.totalorder %s15, 1
    %p80 = por %p78, %p79
    %p82 = scmp.ne.s32.totalorder %s65, %s81
    %p83 = scmp.eq.s32.totalorder %s15, 0
    %p84 = por %p82, %p83
    %s85 = ssub.s32 %s9, %s16
    %p86 = scmp.eq.s32.totalorder %s85, 0
    %s88 = sadd.s32 %s87, 1
    %s89 = scalar_select %p86, %s87, %s88
    %p92 = pneg %p86
    %p93 = scmp.eq.s32.totalorder %s9, 1
    %p94 = por %p92, %p93
    %p95 = scmp.ne.s32.totalorder %s87, %s90
    %p96 = scmp.eq.s32.totalorder %s9, 0
    %p97 = por %p95, %p96
    %p98 = scmp.ne.s32.totalorder %s87, %s90
    %p99 = scmp.eq.s32.totalorder %s14, 1
    %p100 = por %p98, %p99
    %p101 = scmp.ne.s32.totalorder %s90, %s91
    %p102 = scmp.eq.s32.totalorder %s14, 0
    %p103 = por %p101, %p102
    %p104 = scmp.ne.s32.totalorder %s90, %s91
    %p105 = scmp.eq.s32.totalorder %s15, 1
    %p106 = por %p104, %p105
    %p108 = scmp.ne.s32.totalorder %s91, %s107
    %p109 = scmp.eq.s32.totalorder %s15, 0
    %p110 = por %p108, %p109
    %p111 = scmp.le.s32.totalorder 1, %s9
    %p112 = scmp.lt.s32.totalorder %s9, 3
    %p113 = pnand %p111, %p112
    %p114 = pneg %p113
    // Predicated region
    $region9: #{tpu_custom_call.1} parent=5 // pred_check
      _
    $region10: #{tpu_custom_call.1} parent=5 // pred_check_branch
      %116 = sbr.rel (%p113) target = $region12
    $region11: #{tpu_custom_call.1} parent=5 // pred_region
      %s117 = ssub.s32 %s9, 1
      // Predicated region
      $region13: #{tpu_custom_call.1} parent=11 // pred_check
        %p118 = pneg %p30
      $region14: #{tpu_custom_call.1} parent=11 // pred_check_branch
        %120 = sbr.rel (%p118) target = $region16
      $region15: #{tpu_custom_call.1} parent=11 // pred_region
        _
      $region16: #{tpu_custom_call.1} parent=11 // pred_fallthru
        _
      // Predicated region
      $region17: #{tpu_custom_call.1} parent=11 // pred_check
        %p121 = pneg %p51
      $region18: #{tpu_custom_call.1} parent=11 // pred_check_branch
        %123 = sbr.rel (%p121) target = $region20
      $region19: #{tpu_custom_call.1} parent=11 // pred_region
        _
      $region20: #{tpu_custom_call.1} parent=11 // pred_fallthru
        _
    $region12: #{tpu_custom_call.1} parent=5 // pred_fallthru
      _
    %p124 = scmp.lt.s32.totalorder %s9, 2
    // Predicated region
    $region21: #{tpu_custom_call.1} parent=5 // pred_check
      %p125 = pneg %p124
    $region22: #{tpu_custom_call.1} parent=5 // pred_check_branch
      %127 = sbr.rel (%p125) target = $region24
    $region23: #{tpu_custom_call.1} parent=5 // pred_region
      // Predicated region
      $region25: #{tpu_custom_call.1} parent=23 // pred_check
        %p128 = pneg %p71
      $region26: #{tpu_custom_call.1} parent=23 // pred_check_branch
        %130 = sbr.rel (%p128) target = $region28
      $region27: #{tpu_custom_call.1} parent=23 // pred_region
        %p131 = scmp.lt.s32.totalorder %s9, 1
        %s132 = scalar_select %p131, %s9, 1
        %s133 = smul.addr %s132, 3
        %s134 = smul.addr %s133, 8
        %s135 = scalar_lea.vmem %s2, %s134
      $region28: #{tpu_custom_call.1} parent=23 // pred_fallthru
        _
    $region24: #{tpu_custom_call.1} parent=5 // pred_fallthru
      _
    %p136 = scmp.le.s32.totalorder 1, %s9
    %p137 = scmp.lt.s32.totalorder %s9, 3
    %p138 = pnand %p136, %p137
    %p139 = pneg %p138
    // Predicated region
    $region29: #{tpu_custom_call.1} parent=5 // pred_check
      _
    $region30: #{tpu_custom_call.1} parent=5 // pred_check_branch
      %141 = sbr.rel (%p138) target = $region32
    $region31: #{tpu_custom_call.1} parent=5 // pred_region
      %s142 = ssub.s32 %s9, 1
      %p143 = pneg %p30
      %p144 = pneg %p27
      %p145 = pneg %p51
      %p146 = pneg %p48
      %p147 = scmp.lt.s32.totalorder %s14, 1
      %s148 = scalar_select %p147, %s14, 1
      %s149 = smul.addr %s148, 3
      %s150 = smul.addr %s149, 8
      %s151 = scalar_lea.vmem %s2, %s150
      %p152 = pneg %p77
      %p153 = pneg %p74
      %p154 = pneg %p103
      %p155 = pneg %p100
      %p156 = scmp.lt.s32.totalorder %s14, 1
      %s157 = scalar_select %p156, %s14, 1
      %s158 = smul.addr %s157, 2
      %s159 = smul.addr %s158, 8
      %s160 = scalar_lea.vmem %s3, %s159
      %p161 = scmp.lt.s32.totalorder %s14, 1
      %s162 = scalar_select %p161, %s14, 1
      %s163 = smul.addr %s162, 3
      %s164 = smul.addr %s163, 8
      %s165 = scalar_lea.vmem %s2, %s164
      %p166 = scmp.lt.s32.totalorder %s14, 1
      %s167 = scalar_select %p166, %s14, 1
      %s168 = smul.addr %s167, 2
      %s169 = smul.addr %s168, 8
      %s170 = scalar_lea.vmem %s3, %s169
      %v171 = vld [vmem:[%s0] sm:$0x1]
      %v172 = vld [vmem:[%s0 + $0x1] sm:$0x1]
      %v173 = vld [vmem:[%s0 + $0x2] sm:$0x1]
      %v174 = vld [vmem:[%s0 + $0x3] sm:$0x1]
      %v175 = vld [vmem:[%s0 + $0x4] sm:$0x1]
      %v176 = vld [vmem:[%s0 + $0x5] sm:$0x1]
      %v177 = vld [vmem:[%s0 + $0x6] sm:$0x1]
      %v178 = vld [vmem:[%s1] sm:$0x1]
      %v179 = vld [vmem:[%s1 + $0x1] sm:$0x1]
      %v180 = vld [vmem:[%s1 + $0x2] sm:$0x1]
      %v181 = vld [vmem:[%s1 + $0x3] sm:$0x1]
      %v182 = vld [vmem:[%s1 + $0x4] sm:$0x1]
      %v183 = vld [vmem:[%s1 + $0x5] sm:$0x1]
      %v184 = vld [vmem:[%s1 + $0x6] sm:$0x1]
      %v185 = vld [vmem:[%s165] sm:$0xff]
      %v186 = vld [vmem:[%s165 + $0x8] sm:$0x3f]
      %v187 = vlaneseq
      %v188 = vshrl.u32 %v187, 7
      %v189 = vsub.s32 0, %v188
      %v190 = vrot.slane %v171, %v189
      %v191 = vmul.f32 %v185, %v190
      %v192 = vmul.f32 %v186, %v190
      %v193 = vld [vmem:[%s165 + $0x1] sm:$0xff]
      %v194 = vld [vmem:[%s165 + $0x9] sm:$0x3f]
      %v195 = vlaneseq
      %v196 = vshrl.u32 %v195, 7
      %v197 = vsub.s32 0, %v196
      %v198 = vrot.slane %v172, %v197
      %v199 = vmul.f32 %v193, %v198
      %v200 = vmul.f32 %v194, %v198
      %v201 = vld [vmem:[%s165 + $0x2] sm:$0xff]
      %v202 = vld [vmem:[%s165 + $0xa] sm:$0x3f]
      %v203 = vlaneseq
      %v204 = vshrl.u32 %v203, 7
      %v205 = vsub.s32 0, %v204
      %v206 = vrot.slane %v173, %v205
      %v207 = vmul.f32 %v201, %v206
      %v208 = vmul.f32 %v202, %v206
      %v209 = vld [vmem:[%s165 + $0x3] sm:$0xff]
      %v210 = vld [vmem:[%s165 + $0xb] sm:$0x3f]
      %v211 = vlaneseq
      %v212 = vshrl.u32 %v211, 7
      %v213 = vsub.s32 0, %v212
      %v214 = vrot.slane %v174, %v213
      %v215 = vmul.f32 %v209, %v214
      %v216 = vmul.f32 %v210, %v214
      %v217 = vld [vmem:[%s165 + $0x4] sm:$0xff]
      %v218 = vld [vmem:[%s165 + $0xc] sm:$0x3f]
      %v219 = vlaneseq
      %v220 = vshrl.u32 %v219, 7
      %v221 = vsub.s32 0, %v220
      %v222 = vrot.slane %v175, %v221
      %v223 = vmul.f32 %v217, %v222
      %v224 = vmul.f32 %v218, %v222
      %v225 = vld [vmem:[%s165 + $0x5] sm:$0xff]
      %v226 = vld [vmem:[%s165 + $0xd] sm:$0x3f]
      %v227 = vlaneseq
      %v228 = vshrl.u32 %v227, 7
      %v229 = vsub.s32 0, %v228
      %v230 = vrot.slane %v176, %v229
      %v231 = vmul.f32 %v225, %v230
      %v232 = vmul.f32 %v226, %v230
      %v233 = vld [vmem:[%s165 + $0x6] sm:$0xff]
      %v234 = vld [vmem:[%s165 + $0xe] sm:$0x3f]
      %v235 = vlaneseq
      %v236 = vshrl.u32 %v235, 7
      %v237 = vsub.s32 0, %v236
      %v238 = vrot.slane %v177, %v237
      %v239 = vmul.f32 %v233, %v238
      %v240 = vmul.f32 %v234, %v238
      %v241 = vadd.f32 %v191, %v199
      %v242 = vadd.f32 %v192, %v200
      %v243 = vadd.f32 %v207, %v215
      %v244 = vadd.f32 %v208, %v216
      %v245 = vadd.f32 %v223, %v231
      %v246 = vadd.f32 %v224, %v232
      %v247 = vadd.f32 %v241, %v243
      %v248 = vadd.f32 %v242, %v244
      %v249 = vadd.f32 %v245, %v239
      %v250 = vadd.f32 %v246, %v240
      %v251 = vadd.f32 %v247, %v249
      %v252 = vadd.f32 %v248, %v250
      %v253 = vlaneseq
      %v254 = vshrl.u32 %v253, 7
      %v255 = vsub.s32 0, %v254
      %v256 = vrot.slane %v178, %v255
      %v257 = vmul.f32 %v251, %v256
      %v258 = vmul.f32 %v252, %v256
      %259 = vrot.lane.b32.xlu0 %v251, 127
      %v260 = vpop.permute.xlu0 %259
      %261 = vrot.lane.b32.xlu0 %v252, 127
      %v262 = vpop.permute.xlu0 %261
      %v263 = vlaneseq
      %v264 = vshrl.u32 %v263, 7
      %v265 = vsub.s32 0, %v264
      %v266 = vrot.slane %v179, %v265
      %v267 = vmul.f32 %v260, %v266
      %v268 = vmul.f32 %v262, %v266
      %269 = vrot.lane.b32.xlu0 %v251, 126
      %v270 = vpop.permute.xlu0 %269
      %271 = vrot.lane.b32.xlu0 %v252, 126
      %v272 = vpop.permute.xlu0 %271
      %v273 = vlaneseq
      %v274 = vshrl.u32 %v273, 7
      %v275 = vsub.s32 0, %v274
      %v276 = vrot.slane %v180, %v275
      %v277 = vmul.f32 %v270, %v276
      %v278 = vmul.f32 %v272, %v276
      %279 = vrot.lane.b32.xlu0 %v251, 125
      %v280 = vpop.permute.xlu0 %279
      %281 = vrot.lane.b32.xlu0 %v252, 125
      %v282 = vpop.permute.xlu0 %281
      %v283 = vlaneseq
      %v284 = vshrl.u32 %v283, 7
      %v285 = vsub.s32 0, %v284
      %v286 = vrot.slane %v181, %v285
      %v287 = vmul.f32 %v280, %v286
      %v288 = vmul.f32 %v282, %v286
      %289 = vrot.lane.b32.xlu0 %v251, 124
      %v290 = vpop.permute.xlu0 %289
      %291 = vrot.lane.b32.xlu0 %v252, 124
      %v292 = vpop.permute.xlu0 %291
      %v293 = vlaneseq
      %v294 = vshrl.u32 %v293, 7
      %v295 = vsub.s32 0, %v294
      %v296 = vrot.slane %v182, %v295
      %v297 = vmul.f32 %v290, %v296
      %v298 = vmul.f32 %v292, %v296
      %299 = vrot.lane.b32.xlu0 %v251, 123
      %v300 = vpop.permute.xlu0 %299
      %301 = vrot.lane.b32.xlu0 %v252, 123
      %v302 = vpop.permute.xlu0 %301
      %v303 = vlaneseq
      %v304 = vshrl.u32 %v303, 7
      %v305 = vsub.s32 0, %v304
      %v306 = vrot.slane %v183, %v305
      %v307 = vmul.f32 %v300, %v306
      %v308 = vmul.f32 %v302, %v306
      %309 = vrot.lane.b32.xlu0 %v251, 122
      %v310 = vpop.permute.xlu0 %309
      %311 = vrot.lane.b32.xlu0 %v252, 122
      %v312 = vpop.permute.xlu0 %311
      %v313 = vlaneseq
      %v314 = vshrl.u32 %v313, 7
      %v315 = vsub.s32 0, %v314
      %v316 = vrot.slane %v184, %v315
      %v317 = vmul.f32 %v310, %v316
      %v318 = vmul.f32 %v312, %v316
      %v319 = vadd.f32 %v257, %v267
      %v320 = vadd.f32 %v258, %v268
      %v321 = vadd.f32 %v277, %v287
      %v322 = vadd.f32 %v278, %v288
      %v323 = vadd.f32 %v297, %v307
      %v324 = vadd.f32 %v298, %v308
      %v325 = vadd.f32 %v319, %v321
      %v326 = vadd.f32 %v320, %v322
      %v327 = vadd.f32 %v323, %v317
      %v328 = vadd.f32 %v324, %v318
      %v329 = vadd.f32 %v325, %v327
      %v330 = vadd.f32 %v326, %v328
      %331 = vrot.lane.b32.xlu0 %v329, 108
      %v332 = vpop.permute.xlu0 %331
      %333 = vrot.lane.b32.xlu0 %v330, 108
      %v334 = vpop.permute.xlu0 %333
      %335 = vrot.lane.b32.xlu0 %v329, 88
      %v336 = vpop.permute.xlu0 %335
      %337 = vrot.lane.b32.xlu0 %v330, 88
      %v338 = vpop.permute.xlu0 %337
      %339 = vrot.lane.b32.xlu0 %v329, 68
      %v340 = vpop.permute.xlu0 %339
      %341 = vrot.lane.b32.xlu0 %v330, 68
      %v342 = vpop.permute.xlu0 %341
      %v343 = vadd.f32 %v329, %v332
      %v344 = vadd.f32 %v330, %v334
      %v345 = vadd.f32 %v336, %v340
      %v346 = vadd.f32 %v338, %v342
      %v347 = vadd.f32 %v343, %v345
      %v348 = vadd.f32 %v344, %v346
      %349 = vst [vmem:[%s170] sm:$0xff] %v347
      %350 = vst [vmem:[%s170 + $0x8] sm:$0x3f] %v348
      %p351 = scmp.lt.s32.totalorder %s14, 1
      %s352 = scalar_select %p351, %s14, 1
      %s353 = smul.addr %s352, 2
      %s354 = smul.addr %s353, 8
      %s355 = scalar_lea.vmem %s3, %s354
      // Predicated region
      $region33: #{tpu_custom_call.1} parent=31 // pred_check
        %p356 = pneg %p100
      $region34: #{tpu_custom_call.1} parent=31 // pred_check_branch
        %358 = sbr.rel (%p356) target = $region36
      $region35: #{tpu_custom_call.1} parent=31 // pred_region
        _
      $region36: #{tpu_custom_call.1} parent=31 // pred_fallthru
        _
    $region32: #{tpu_custom_call.1} parent=5 // pred_fallthru
      _
    %p359 = scmp.le.s32.totalorder 2, %s9
    // Predicated region
    $region37: #{tpu_custom_call.1} parent=5 // pred_check
      %p360 = pneg %p359
    $region38: #{tpu_custom_call.1} parent=5 // pred_check_branch
      %362 = sbr.rel (%p360) target = $region40
    $region39: #{tpu_custom_call.1} parent=5 // pred_region
      %s363 = ssub.s32 %s9, 2
      // Predicated region
      $region41: #{tpu_custom_call.1} parent=39 // pred_check
        %p364 = pneg %p106
      $region42: #{tpu_custom_call.1} parent=39 // pred_check_branch
        %366 = sbr.rel (%p364) target = $region44
      $region43: #{tpu_custom_call.1} parent=39 // pred_region
        %p367 = scmp.lt.s32.totalorder %s15, 1
        %s368 = scalar_select %p367, %s15, 1
        %s369 = smul.addr %s368, 2
        %s370 = smul.addr %s369, 8
        %s371 = scalar_lea.vmem %s3, %s370
      $region44: #{tpu_custom_call.1} parent=39 // pred_fallthru
        _
    $region40: #{tpu_custom_call.1} parent=5 // pred_fallthru
      _
  $region6: #{tpu_custom_call.1} parent=0 // loop_footer
    %s13 = sadd.s32 1, %s9
  $region7: #{tpu_custom_call.1} parent=0 // loop_footer_branch
    %8 = sbr.rel target = $region3
  $region8: #{tpu_custom_call.1} parent=0 // loop_exit
    _

</llo_original>
